<compile_context>
chip_gen: v7x
topology: tpu7x:2x2x1
jax: 0.10.0
libtpu: 0.0.40
codegen_flags: <defaults>
</compile_context>

<pallas_src>
import numpy as np

import jax
import jax.numpy as jnp
from jax.experimental import pallas as pl
from jax.experimental.pallas import tpu as pltpu

LANE = 128


def masked_conv_kernel(w_ref, b_ref, p_ref, o_ref):
    """out(Co, M_tile) = W(Co, K) @ P(K, M_tile) + b(Co, 1).

    w_ref : (Co, K)       bf16 VMEM  (pre-masked, tap-packed weight; constant)
    b_ref : (Co, 1)       f32  VMEM  (bias; constant)
    p_ref : (K, M_tile)   bf16 VMEM  (im2col patches, lane-dense M tile)
    o_ref : (Co, M_tile)  VMEM       (lane-dense output tile)
    """
    acc = jnp.dot(w_ref[...], p_ref[...], preferred_element_type=jnp.float32)
    o_ref[...] = (acc + b_ref[...]).astype(o_ref.dtype)


def _choose_m_tile(m_pad):
    """Lane-aligned M tile: <= ~2048 rows/step, >= 2 grid steps when possible."""
    blocks = m_pad // LANE
    tile_blocks = min(blocks, 2048 // LANE)
    if blocks >= 2:  # >=2 steps -> pipelining works and both v7x TCs get work
        tile_blocks = min(tile_blocks, max(blocks // 2, 1))
    while blocks % tile_blocks:
        tile_blocks -= 1
    return tile_blocks * LANE


def make_masked_convolution(weight_oihw, bias, mask):
    """Build a jitted forward(x) for MaskedConvolution (stride=1, dilation=1).

    Constant prep (mask fold, live-tap packing, bf16 cast) runs once here,
    outside the per-call path. `mask` must be a host (numpy) array so dead taps
    can be dropped statically.
    """
    # TODO(synk): dilation/stride kwargs of nn.Conv2d are not wired through.
    mask_np = np.asarray(mask, dtype=np.float32)
    C_out, C_in, KH, KW = weight_oihw.shape
    assert mask_np.shape == (KH, KW)
    assert KH % 2 == 1 and KW % 2 == 1, "only odd kernel sizes are supported"
    ph, pw = (KH - 1) // 2, (KW - 1) // 2

    # Static live-tap list: taps the mask zeroes out never appear anywhere.
    taps = tuple((i, j) for i in range(KH) for j in range(KW)
                 if mask_np[i, j] != 0.0)
    n_live = len(taps)
    K = n_live * C_in

    if n_live:
        w_m = (jnp.asarray(weight_oihw, jnp.float32)
               * jnp.asarray(mask_np)[None, None, :, :])
        # (Co, live, Ci) -> (Co, live*Ci); contraction index = tap*Ci + ci.
        w_taps = jnp.stack([w_m[:, :, i, j] for (i, j) in taps], axis=1)
        w_packed = w_taps.reshape(C_out, K).astype(jnp.bfloat16)
    else:
        w_packed = None
    b_col = jnp.asarray(bias, jnp.float32).reshape(C_out, 1)

    @jax.jit
    def forward(x_nchw):
        N, Ci, H, W = x_nchw.shape
        assert Ci == C_in
        out_dtype = x_nchw.dtype

        if n_live == 0:  # degenerate: everything masked -> output is the bias
            return jnp.broadcast_to(
                b_col.reshape(1, C_out, 1, 1), (N, C_out, H, W)).astype(out_dtype)

        # ---- XLA glue: spatial pad + lane-dense im2col (K, M) ---------------
        x_bf = x_nchw.astype(jnp.bfloat16)
        x_pad = jnp.pad(x_bf, ((0, 0), (0, 0), (ph, ph), (pw, pw)))
        cols = [x_pad[:, :, i:i + H, j:j + W] for (i, j) in taps]  # (N,Ci,H,W)
        patches = jnp.stack(cols, axis=0)              # (live, N, Ci, H, W)
        patches = patches.transpose(0, 2, 1, 3, 4)     # (live, Ci, N, H, W)
        M_total = N * H * W
        patches = patches.reshape(K, M_total)          # (K, M), M on lanes

        M_pad = ((M_total + LANE - 1) // LANE) * LANE
        if M_pad != M_total:
            patches = jnp.pad(patches, ((0, 0), (0, M_pad - M_total)))
        m_tile = _choose_m_tile(M_pad)

        # ---- Pallas call: plain tiled matmul over lane-dense M tiles --------
        # Per step: P block (K, m_tile) bf16 + out block (Co, m_tile); a few
        # tens of KB double-buffered -> comfortably inside v7x's 64 MiB VMEM.
        # NOTE: weight/bias index maps are constant, so Pallas does not re-DMA
        # them across grid steps; their duplicate pipeline buffers are only a
        # few hundred bytes here (switch to pl.Buffered(1) / scratch residency
        # if channel counts grow).
        out_flat = pl.pallas_call(
            masked_conv_kernel,
            out_shape=jax.ShapeDtypeStruct((C_out, M_pad), out_dtype),
            grid=(M_pad // m_tile,),
            in_specs=[
                pl.BlockSpec((C_out, K), lambda m: (0, 0)),
                pl.BlockSpec((C_out, 1), lambda m: (0, 0)),
                pl.BlockSpec((K, m_tile), lambda m: (0, m)),
            ],
            out_specs=pl.BlockSpec((C_out, m_tile), lambda m: (0, m)),
            compiler_params=pltpu.CompilerParams(
                dimension_semantics=("parallel",),
                vmem_limit_bytes=32 * 1024 * 1024),  # modest; <= 48 MiB for v7x
        )(w_packed, b_col, patches)

        # Drop M padding, back to PyTorch NCHW layout.
        out = out_flat[:, :M_total].reshape(C_out, N, H, W)
        return jnp.transpose(out, (1, 0, 2, 3))

    return forward


if __name__ == "__main__":
    key = jax.random.PRNGKey(0)
    N, C_in, C_out, H, W = 2, 4, 4, 16, 16
    KH, KW = 3, 3

    # PixelCNN-style mask: keep rows above center and the center row up to and
    # including the center pixel; zero out "future" pixels. Built in numpy so
    # it folds at build time (dead taps skipped statically).
    mask = np.ones((KH, KW), np.float32)
    mask[KH // 2, KW // 2 + 1:] = 0.0
    mask[KH // 2 + 1:, :] = 0.0

    k_x, k_w, k_b = jax.random.split(key, 3)
    x = jax.random.normal(k_x, (N, C_in, H, W), jnp.float32)
    # Deterministic Conv2d-like init (uniform in +/- 1/sqrt(fan_in)).
    bound = 1.0 / float(np.sqrt(C_in * KH * KW))
    weight = jax.random.uniform(k_w, (C_out, C_in, KH, KW), jnp.float32,
                                minval=-bound, maxval=bound)
    bias = jax.random.uniform(k_b, (C_out,), jnp.float32,
                              minval=-bound, maxval=bound)

    conv = make_masked_convolution(weight, bias, mask)
    out = jax.block_until_ready(conv(x))

    # Reference: standard XLA conv with masked weights (same semantics as
    # `self.conv.weight.data *= self.mask; self.conv(x)`). Inputs are rounded
    # through bf16 to match the kernel's MXU feed; both accumulate in f32.
    # (Parity vs. a pure-f32 PyTorch Conv2d is therefore ~1e-2 level.)
    x_bf = x.astype(jnp.bfloat16).astype(jnp.float32)
    w_masked = (weight * jnp.asarray(mask)[None, None, :, :]
                ).astype(jnp.bfloat16).astype(jnp.float32)
    ref = jax.lax.conv_general_dilated(
        x_bf, w_masked, window_strides=(1, 1),
        padding=((KH - 1) // 2, (KH - 1) // 2), 
        dimension_numbers=("NCHW", "OIHW", "NCHW")) if False else \
        jax.lax.conv_general_dilated(
            x_bf, w_masked, window_strides=(1, 1),
            padding=(((KH - 1) // 2, (KH - 1) // 2),
                     ((KW - 1) // 2, (KW - 1) // 2)),
            dimension_numbers=("NCHW", "OIHW", "NCHW"))
    ref = ref + bias[None, :, None, None]

    assert out.shape == (N, C_out, H, W), out.shape
    max_err = float(jnp.max(jnp.abs(out - ref)))
    assert jnp.allclose(out, ref, atol=5e-3, rtol=5e-3), max_err
    print("KERNEL_OK")
</pallas_src>

<mosaic_0001>
module attributes {stable_mosaic.version = 11 : i64} {
  func.func @masked_conv_kernel(%arg0: i32, %arg1: memref<4x20xbf16, #tpu.memory_space<vmem>>, %arg2: memref<4x1xf32, #tpu.memory_space<vmem>>, %arg3: memref<20x256xbf16, #tpu.memory_space<vmem>>, %arg4: memref<4x256xf32, #tpu.memory_space<vmem>>) attributes {dimension_semantics = [#tpu.dimension_semantics<parallel>], iteration_bounds = array<i64: 2>, scalar_prefetch = 0 : i64, scratch_operands = 0 : i64, tpu.core_type = #tpu.core_type<tc>, window_params = [{pipeline_mode = #tpu.pipeline_mode<synchronous>, transform_indices = @transform_0, window_bounds = array<i64: 4, 20>}, {pipeline_mode = #tpu.pipeline_mode<synchronous>, transform_indices = @transform_1, window_bounds = array<i64: 4, 1>}, {transform_indices = @transform_2, window_bounds = array<i64: 20, 256>}, {transform_indices = @transform_3, window_bounds = array<i64: 4, 256>}]} {
    %c0 = arith.constant 0 : index
    %c0_0 = arith.constant 0 : index
    %0 = vector.load %arg1[%c0, %c0_0] : memref<4x20xbf16, #tpu.memory_space<vmem>>, vector<4x20xbf16>
    %c0_1 = arith.constant 0 : index
    %c0_2 = arith.constant 0 : index
    %1 = vector.load %arg3[%c0_1, %c0_2] : memref<20x256xbf16, #tpu.memory_space<vmem>>, vector<20x256xbf16>
    %cst = arith.constant dense<0.000000e+00> : vector<4x256xf32>
    %2 = tpu.matmul %0, %1, %cst {dimension_numbers = #tpu.dot_dimension_numbers<[1], [0], [0], [1], [0, 0, 1, 1], [], []>} : vector<4x20xbf16>, vector<20x256xbf16>, vector<4x256xf32> -> vector<4x256xf32>
    %c0_3 = arith.constant 0 : index
    %c0_4 = arith.constant 0 : index
    %3 = vector.load %arg2[%c0_3, %c0_4] : memref<4x1xf32, #tpu.memory_space<vmem>>, vector<4x1xf32>
    %4 = vector.broadcast %3 : vector<4x1xf32> to vector<4x256xf32>
    %5 = arith.addf %2, %4 : vector<4x256xf32>
    %c0_5 = arith.constant 0 : index
    %c0_6 = arith.constant 0 : index
    %6 = vector.load %arg4[%c0_5, %c0_6] : memref<4x256xf32, #tpu.memory_space<vmem>>, vector<4x256xf32>
    tpu.vector_store %arg4[%c0_5, %c0_6], %5 {strides = array<i32>} : memref<4x256xf32, #tpu.memory_space<vmem>>, vector<4x256xf32>,
    return
  }
  func.func @transform_0(%arg0: i32) -> (i32, i32) {
    %c0_i32 = arith.constant 0 : i32
    %c0_i32_0 = arith.constant 0 : i32
    %c0_i32_1 = arith.constant 0 : i32
    return %c0_i32, %c0_i32_0 : i32, i32
  }
  func.func @transform_1(%arg0: i32) -> (i32, i32) {
    %c0_i32 = arith.constant 0 : i32
    %c0_i32_0 = arith.constant 0 : i32
    %c0_i32_1 = arith.constant 0 : i32
    return %c0_i32, %c0_i32_0 : i32, i32
  }
  func.func @transform_2(%arg0: i32) -> (i32, i32) {
    %c0_i32 = arith.constant 0 : i32
    %c0_i32_0 = arith.constant 0 : i32
    return %c0_i32, %arg0 : i32, i32
  }
  func.func @transform_3(%arg0: i32) -> (i32, i32) {
    %c0_i32 = arith.constant 0 : i32
    %c0_i32_0 = arith.constant 0 : i32
    return %c0_i32, %arg0 : i32, i32
  }
}

</mosaic_0001>

<llo_original>
// kernel: forward.1
$region0: #{forward.1}
  #allocation0 [shape = 'u32[]', space=smem, size = 0x4, offset = 0x4, fixed_abs, tag = 'smem constant byte address 0x4 - core index']
  #allocation1 [shape = 'u32[144,128]{1,0:T(1,128)}', space=vmem, size = 0x12000, scoped, tag = 'internal scratch']
  %s0 = inlined_call_operand.vmem [shape: bf16[4,20], index: 0, kind: input, shape index: {}]
  %s1 = inlined_call_operand.vmem [shape: f32[4,1], index: 1, kind: input, shape index: {}]
  %s2 = inlined_call_operand.vmem [shape: bf16[20,512], index: 2, kind: input, shape index: {}]
  %s3 = inlined_call_operand.vmem [shape: f32[4,512], index: 3, kind: output, shape index: {}]
  %s4 = sld [smem:[#allocation0]]
  $region83: #{forward.1} parent=0
    _
  %s6 = ssub.s32 1, %s4
  %s7 = scalar_select 0, %s6, %s4
  $region1: #{forward.1} parent=0
    #allocation2 [shape = 'u8[24576]{0}', space=vmem, size = 0x6000, scoped, tag = 'input window, operand 2']
    loop: start=0, step=1, limit=4
    $region2: #{forward.1} parent=1 // loop_pre_header
      _
    $region3: #{forward.1} parent=1 // loop_header
      %s9 = sphi 0, %s13
      %p10 = scmp.ge.s32.totalorder %s9, 4
      %s17 = sphi 0, %s17
      %s19 = sphi 0, %s17
      %s20 = sphi 0, %s19
      %s34 = sphi 0, %s20
      %s38 = sphi 0, %s38
      %s40 = sphi 0, %s38
      %s41 = sphi 0, %s40
      %s55 = sphi 0, %s41
      %s61 = sphi 0, %s63
      %s64 = sphi 0, %s61
      %s65 = sphi 0, %s64
      %s81 = sphi 0, %s65
      %s87 = sphi 0, %s89
      %s90 = sphi 0, %s87
      %s91 = sphi 0, %s90
      %s107 = sphi 0, %s91
    $region4: #{forward.1} parent=1 // loop_header_branch
      %12 = sbr.rel (%p10) target = $region8
    $region5: #{forward.1} parent=1 // loop_body
      %s14 = ssub.s32 %s9, 1
      %s15 = ssub.s32 %s9, 2
      %s16 = sadd.s32 %s9, 1
      %s18 = sadd.s32 %s17, 1
      %p21 = scmp.eq.s32.totalorder %s9, 1
      %p22 = scmp.ne.s32.totalorder %s17, %s19
      %p23 = scmp.eq.s32.totalorder %s9, 0
      %p24 = por %p22, %p23
      %p25 = scmp.ne.s32.totalorder %s17, %s19
      %p26 = scmp.eq.s32.totalorder %s14, 1
      %p27 = por %p25, %p26
      %p28 = scmp.ne.s32.totalorder %s19, %s20
      %p29 = scmp.eq.s32.totalorder %s14, 0
      %p30 = por %p28, %p29
      %p31 = scmp.ne.s32.totalorder %s19, %s20
      %p32 = scmp.eq.s32.totalorder %s15, 1
      %p33 = por %p31, %p32
      %p35 = scmp.ne.s32.totalorder %s20, %s34
      %p36 = scmp.eq.s32.totalorder %s15, 0
      %p37 = por %p35, %p36
      %s39 = sadd.s32 %s38, 1
      %p42 = scmp.eq.s32.totalorder %s9, 1
      %p43 = scmp.ne.s32.totalorder %s38, %s40
      %p44 = scmp.eq.s32.totalorder %s9, 0
      %p45 = por %p43, %p44
      %p46 = scmp.ne.s32.totalorder %s38, %s40
      %p47 = scmp.eq.s32.totalorder %s14, 1
      %p48 = por %p46, %p47
      %p49 = scmp.ne.s32.totalorder %s40, %s41
      %p50 = scmp.eq.s32.totalorder %s14, 0
      %p51 = por %p49, %p50
      %p52 = scmp.ne.s32.totalorder %s40, %s41
      %p53 = scmp.eq.s32.totalorder %s15, 1
      %p54 = por %p52, %p53
      %p56 = scmp.ne.s32.totalorder %s41, %s55
      %p57 = scmp.eq.s32.totalorder %s15, 0
      %p58 = por %p56, %p57
      %s59 = ssub.s32 %s9, %s16
      %p60 = scmp.eq.s32.totalorder %s59, 0
      %s62 = sadd.s32 %s61, 1
      %s63 = scalar_select %p60, %s61, %s62
      %p66 = pneg %p60
      %p67 = scmp.eq.s32.totalorder %s9, 1
      %p68 = por %p66, %p67
      %p69 = scmp.ne.s32.totalorder %s61, %s64
      %p70 = scmp.eq.s32.totalorder %s9, 0
      %p71 = por %p69, %p70
      %p72 = scmp.ne.s32.totalorder %s61, %s64
      %p73 = scmp.eq.s32.totalorder %s14, 1
      %p74 = por %p72, %p73
      %p75 = scmp.ne.s32.totalorder %s64, %s65
      %p76 = scmp.eq.s32.totalorder %s14, 0
      %p77 = por %p75, %p76
      %p78 = scmp.ne.s32.totalorder %s64, %s65
      %p79 = scmp.eq.s32.totalorder %s15, 1
      %p80 = por %p78, %p79
      %p82 = scmp.ne.s32.totalorder %s65, %s81
      %p83 = scmp.eq.s32.totalorder %s15, 0
      %p84 = por %p82, %p83
      %s85 = ssub.s32 %s9, %s16
      %p86 = scmp.eq.s32.totalorder %s85, 0
      %s88 = sadd.s32 %s87, 1
      %s89 = scalar_select %p86, %s87, %s88
      %p92 = pneg %p86
      %p93 = scmp.eq.s32.totalorder %s9, 1
      %p94 = por %p92, %p93
      %p95 = scmp.ne.s32.totalorder %s87, %s90
      %p96 = scmp.eq.s32.totalorder %s9, 0
      %p97 = por %p95, %p96
      %p98 = scmp.ne.s32.totalorder %s87, %s90
      %p99 = scmp.eq.s32.totalorder %s14, 1
      %p100 = por %p98, %p99
      %p101 = scmp.ne.s32.totalorder %s90, %s91
      %p102 = scmp.eq.s32.totalorder %s14, 0
      %p103 = por %p101, %p102
      %p104 = scmp.ne.s32.totalorder %s90, %s91
      %p105 = scmp.eq.s32.totalorder %s15, 1
      %p106 = por %p104, %p105
      %p108 = scmp.ne.s32.totalorder %s91, %s107
      %p109 = scmp.eq.s32.totalorder %s15, 0
      %p110 = por %p108, %p109
      %p111 = scmp.le.s32.totalorder 1, %s9
      %p112 = scmp.lt.s32.totalorder %s9, 3
      %p113 = pnand %p111, %p112
      %p114 = pneg %p113
      // Predicated region
      $region9: #{forward.1} parent=5 // pred_check
        _
      $region10: #{forward.1} parent=5 // pred_check_branch
        %116 = sbr.rel (%p113) target = $region12
      $region11: #{forward.1} parent=5 // pred_region
        %s117 = ssub.s32 %s9, 1
        // Predicated region
        $region13: #{forward.1} parent=11 // pred_check
          %p118 = pneg %p30
        $region14: #{forward.1} parent=11 // pred_check_branch
          %120 = sbr.rel (%p118) target = $region16
        $region15: #{forward.1} parent=11 // pred_region
          _
        $region16: #{forward.1} parent=11 // pred_fallthru
          _
        // Predicated region
        $region17: #{forward.1} parent=11 // pred_check
          %p121 = pneg %p51
        $region18: #{forward.1} parent=11 // pred_check_branch
          %123 = sbr.rel (%p121) target = $region20
        $region19: #{forward.1} parent=11 // pred_region
          _
        $region20: #{forward.1} parent=11 // pred_fallthru
          _
      $region12: #{forward.1} parent=5 // pred_fallthru
        _
      %p124 = scmp.lt.s32.totalorder %s9, 2
      // Predicated region
      $region21: #{forward.1} parent=5 // pred_check
        %p125 = pneg %p124
      $region22: #{forward.1} parent=5 // pred_check_branch
        %127 = sbr.rel (%p125) target = $region24
      $region23: #{forward.1} parent=5 // pred_region
        // Predicated region
        $region25: #{forward.1} parent=23 // pred_check
          %p128 = pneg %p71
        $region26: #{forward.1} parent=23 // pred_check_branch
          %130 = sbr.rel (%p128) target = $region28
        $region27: #{forward.1} parent=23 // pred_region
          %s131 = sand.u32 %s61, 1
          %s132 = sand.u32 %s61, 1
          %s133 = smul.addr %s132, 24
          %s134 = scalar_lea.vmem [#allocation2], %s133
          %s135 = smul.u32 2, %s9
          %s136 = smul.addr %s135, 4
          %s137 = scalar_lea.vmem %s2, %s136
          // Predicated region
          $region29: #{forward.1} parent=27 // pred_check
            _
          $region30: #{forward.1} parent=27 // pred_check_branch
            %139 = sbr.rel (0) target = $region32
          $region31: #{forward.1} parent=27 // pred_region
            // Predicated region
            $region33: #{forward.1} parent=31 // pred_check
              _
            $region34: #{forward.1} parent=31 // pred_check_branch
              %141 = sbr.rel (0) target = $region36
            $region35: #{forward.1} parent=31 // pred_region
              // Predicated region
              $region48: #{forward.1} parent=35 // pred_check
                _
              $region49: #{forward.1} parent=35 // pred_check_branch
                %160 = sbr.rel (0) target = $region51
              $region50: #{forward.1} parent=35 // pred_region
                loop: start=0, step=1, limit=1
                $region52: #{forward.1} parent=50 // loop_pre_header
                  _
                $region53: #{forward.1} parent=50 // loop_header
                  %s162 = sphi 0, %s166
                  %p163 = scmp.ge.s32.totalorder %s162, 1
                  %s167 = sphi %s137, %s137
                  %s168 = sphi %s134, %s134
                $region54: #{forward.1} parent=50 // loop_header_branch
                  %165 = sbr.rel (%p163) target = $region58
                $region55: #{forward.1} parent=50 // loop_body
                  %v169 = vld [vmem:[%s167] sm:$0xff]
                  %170 = vst [vmem:[%s168] sm:$0xff] %v169
                  %v171 = vld [vmem:[%s167 + $0x10] sm:$0xff]
                  %172 = vst [vmem:[%s168 + $0x8] sm:$0xff] %v171
                  %v173 = vld [vmem:[%s167 + $0x20] sm:$0xff]
                  %174 = vst [vmem:[%s168 + $0x10] sm:$0xff] %v173
                $region56: #{forward.1} parent=50 // loop_footer
                  %s166 = sadd.s32 1, %s162
                $region57: #{forward.1} parent=50 // loop_footer_branch
                  %161 = sbr.rel target = $region53
                $region58: #{forward.1} parent=50 // loop_exit
                  _
              $region51: #{forward.1} parent=35 // pred_fallthru
                _
              // Predicated region
              $region59: #{forward.1} parent=35 // pred_check
                _
              $region60: #{forward.1} parent=35 // pred_check_branch
                %176 = sbr.rel target = $region62
              $region61: #{forward.1} parent=35 // pred_region
                _
              $region62: #{forward.1} parent=35 // pred_fallthru
                _
            $region36: #{forward.1} parent=31 // pred_fallthru
              _
            // Predicated region
            $region37: #{forward.1} parent=31 // pred_check
              _
            $region38: #{forward.1} parent=31 // pred_check_branch
              %143 = sbr.rel target = $region40
            $region39: #{forward.1} parent=31 // pred_region
              loop: start=0, step=1, limit=1
              $region41: #{forward.1} parent=39 // loop_pre_header
                _
              $region42: #{forward.1} parent=39 // loop_header
                %s146 = sphi 0, %s150
                %p147 = scmp.ge.s32.totalorder %s146, 1
                %s151 = sphi %s137, %s137
                %s152 = sphi %s134, %s134
              $region43: #{forward.1} parent=39 // loop_header_branch
                %149 = sbr.rel (%p147) target = $region47
              $region44: #{forward.1} parent=39 // loop_body
                %v153 = vld [vmem:[%s151] sm:$0xff]
                %154 = vst [vmem:[%s152] sm:$0xff] %v153
                %v155 = vld [vmem:[%s151 + $0x10] sm:$0xff]
                %156 = vst [vmem:[%s152 + $0x8] sm:$0xff] %v155
                %v157 = vld [vmem:[%s151 + $0x20] sm:$0xff]
                %158 = vst [vmem:[%s152 + $0x10] sm:$0xff] %v157
              $region45: #{forward.1} parent=39 // loop_footer
                %s150 = sadd.s32 1, %s146
              $region46: #{forward.1} parent=39 // loop_footer_branch
                %145 = sbr.rel target = $region42
              $region47: #{forward.1} parent=39 // loop_exit
                _
            $region40: #{forward.1} parent=31 // pred_fallthru
              _
          $region32: #{forward.1} parent=27 // pred_fallthru
            _
          %177 = vnop
        $region28: #{forward.1} parent=23 // pred_fallthru
          _
      $region24: #{forward.1} parent=5 // pred_fallthru
        _
      %p178 = scmp.le.s32.totalorder 1, %s9
      %p179 = scmp.lt.s32.totalorder %s9, 3
      %p180 = pnand %p178, %p179
      %p181 = pneg %p180
      // Predicated region
      $region63: #{forward.1} parent=5 // pred_check
        _
      $region64: #{forward.1} parent=5 // pred_check_branch
        %183 = sbr.rel (%p180) target = $region66
      $region65: #{forward.1} parent=5 // pred_region
        %s184 = ssub.s32 %s9, 1
        %s185 = sand.u32 %s64, 1
        %s186 = sand.u32 %s64, 1
        %s187 = smul.addr %s186, 24
        %s188 = scalar_lea.vmem [#allocation2], %s187
        // Predicated region
        $region67: #{forward.1} parent=65 // pred_check
          %p189 = pneg %p77
        $region68: #{forward.1} parent=65 // pred_check_branch
          %191 = sbr.rel (%p189) target = $region70
        $region69: #{forward.1} parent=65 // pred_region
          _
        $region70: #{forward.1} parent=65 // pred_fallthru
          _
        %p192 = pneg %p30
        %p193 = pneg %p27
        %p194 = pneg %p51
        %p195 = pneg %p48
        %s196 = sand.u32 %s64, 1
        %s197 = sand.u32 %s64, 1
        %s198 = smul.addr %s197, 24
        %s199 = scalar_lea.vmem [#allocation2], %s198
        %p200 = pneg %p77
        %p201 = pneg %p74
        %p202 = pneg %p103
        %p203 = pneg %p100
        %s204 = smul.u32 2, %s14
        %p205 = scmp.lt.s32.totalorder %s204, 3
        %s206 = scalar_select %p205, %s204, 3
        %s207 = smul.addr %s206, 4
        %s208 = scalar_lea.vmem %s3, %s207
        %s209 = smul.u32 2, %s14
        %s210 = smul.u32 2, %s14
        %p211 = scmp.lt.s32.totalorder %s210, 3
        %s212 = scalar_select %p211, %s210, 3
        %s213 = smul.addr %s212, 4
        %s214 = scalar_lea.vmem %s3, %s213
        %s215 = smul.u32 2, %s14
        %v217 = vld [vmem:[%s0] sm:$0x3]
        %v218 = vld [vmem:[%s188] sm:$0xff]
        %v219 = vld [vmem:[%s188 + $0x8] sm:$0xff]
        %v220 = vld [vmem:[%s188 + $0x10] sm:$0x33]
        %v221 = vld [vmem:[%s1] sm:$0xf]
        %223 = vset.pattern.permute.xlu0 0
        %224 = vperm.xlu0 %223, %v221
        %v225 = vpop.permute.xlu0 %224
        %v230 = vunpack.c.l.b16 %v218
        %v231 = vunpack.c.h.b16 %v218
        %v232 = vunpack.c.l.b16 %v219
        %v233 = vunpack.c.h.b16 %v219
        %v234 = vunpack.c.l.b16 %v220
        %v235 = vunpack.c.h.b16 %v220
        %v236 = vpack.c.b16 %v232, %v230
        %v237 = vpack.c.b16 %v233, %v231
        %v238 = vpack.c.b16 %v234, %v234
        %v239 = vpack.c.b16 %v235, %v235
        %vm242 = vcmask 162816
        %v244 = vsel %vm242, %v217, 0
        %vm246 = vcmask 1041408
        %v248 = vsel %vm246, %v238, 0
        %v251 = vsel %vm246, %v239, 0
        %253 = vmatprep.subr.bf16.mxu0 %v237
        %254 = vmatpush1.bf16.msra.mxu0 %v236
        %255 = vmatprep.subr.bf16.mxu0 %v251
        %256 = vmatpush1.bf16.msra.mxu0 %v248
        %257 = vmatprep.subr.bf16.mxu0 0
        %258 = vmatpush1.bf16.msra.mxu0 0
        %259 = vmatprep.subr.bf16.mxu0 0
        %260 = vmatpush1.bf16.msra.mxu0 0
        %261 = vmatprep.subr.bf16.mxu0 0
        %262 = vmatpush1.bf16.msra.mxu0 0
        %263 = vmatprep.subr.bf16.mxu0 0
        %264 = vmatpush1.bf16.msra.mxu0 0
        %265 = vmatprep.subr.bf16.mxu0 0
        %266 = vmatpush1.bf16.msra.mxu0 0
        %267 = vmatprep.subr.bf16.mxu0 0
        %268 = vmatpush1.bf16.msra.mxu0 0
        %269 = vmatprep.subr.bf16.mxu0 0
        %270 = vmatpush1.bf16.msra.mxu0 0
        %271 = vmatprep.subr.bf16.mxu0 0
        %272 = vmatpush1.bf16.msra.mxu0 0
        %273 = vmatprep.subr.bf16.mxu0 0
        %274 = vmatpush1.bf16.msra.mxu0 0
        %275 = vmatprep.subr.bf16.mxu0 0
        %276 = vmatpush1.bf16.msra.mxu0 0
        %277 = vmatprep.subr.bf16.mxu0 0
        %278 = vmatpush1.bf16.msra.mxu0 0
        %279 = vmatprep.subr.bf16.mxu0 0
        %280 = vmatpush1.bf16.msra.mxu0 0
        %281 = vmatprep.subr.bf16.mxu0 0
        %282 = vmatpush1.bf16.msra.mxu0 0
        %283 = vmatprep.subr.bf16.mxu0 0
        %284 = vmatpush1.bf16.msra.mxu0 0
        %285 = vmatprep.mubr.bf16.mxu0 0
        %286 = vmatmul.mubr.bf16.gmra.mrb[0].mxu0 %v244
        %v287 = vpop.f32.mrb[0].mxu0
        %v288 = vadd.f32 %v225, %v287
        %v289 = vpop.f32.mrb[0].mxu0
        %v290 = vadd.f32 %v225, %v289
        %v291 = vpop.f32.mrb[0].mxu0
        %v292 = vpop.f32.mrb[0].mxu0
        %293 = vdwg.mxu0
        %v296 = vcombine.low %v288, %v290
        %298 = vst [vmem:[%s214] sm:$0xff] %v296
        %s299 = smul.u32 2, %s14
        %p300 = scmp.lt.s32.totalorder %s299, 3
        %s301 = scalar_select %p300, %s299, 3
        %s302 = smul.addr %s301, 4
        %s303 = scalar_lea.vmem %s3, %s302
        // Predicated region
        $region71: #{forward.1} parent=65 // pred_check
          %p304 = pneg %p100
        $region72: #{forward.1} parent=65 // pred_check_branch
          %306 = sbr.rel (%p304) target = $region74
        $region73: #{forward.1} parent=65 // pred_region
          %s307 = smul.u32 2, %s14
        $region74: #{forward.1} parent=65 // pred_fallthru
          _
      $region66: #{forward.1} parent=5 // pred_fallthru
        _
      %p308 = scmp.le.s32.totalorder 2, %s9
      // Predicated region
      $region75: #{forward.1} parent=5 // pred_check
        %p309 = pneg %p308
      $region76: #{forward.1} parent=5 // pred_check_branch
        %311 = sbr.rel (%p309) target = $region78
      $region77: #{forward.1} parent=5 // pred_region
        %s312 = ssub.s32 %s9, 2
        // Predicated region
        $region79: #{forward.1} parent=77 // pred_check
          %p313 = pneg %p106
        $region80: #{forward.1} parent=77 // pred_check_branch
          %315 = sbr.rel (%p313) target = $region82
        $region81: #{forward.1} parent=77 // pred_region
          %s316 = smul.u32 2, %s15
          %p317 = scmp.lt.s32.totalorder %s316, 3
          %s318 = scalar_select %p317, %s316, 3
          %s319 = smul.addr %s318, 4
          %s320 = scalar_lea.vmem %s3, %s319
        $region82: #{forward.1} parent=77 // pred_fallthru
          _
      $region78: #{forward.1} parent=5 // pred_fallthru
        _
    $region6: #{forward.1} parent=1 // loop_footer
      %s13 = sadd.s32 1, %s9
    $region7: #{forward.1} parent=1 // loop_footer_branch
      %8 = sbr.rel target = $region3
    $region8: #{forward.1} parent=1 // loop_exit
      _

</llo_original>
